<compile_context>
chip_gen: v7x
topology: tpu7x:2x2x1
jax: 0.10.0
libtpu: 0.0.40
codegen_flags: <defaults>
</compile_context>

<pallas_src>
import jax
import jax.numpy as jnp
from jax.experimental import pallas as pl
from jax.experimental.pallas import tpu as pltpu

LANE = 128       # TPU lane width (last-dim tile)
MAX_TB = 512     # cap on the batch tile


def _round_up(a, m):
    return (a + m - 1) // m * m


def _sublane(dtype):
    # f32 -> 8 rows per vreg sublane group, bf16 -> 16 (packed), etc.
    return 8 * (4 // jnp.dtype(dtype).itemsize)


def _choose_tb(batch, sublane):
    """Batch tile: one tile for tiny batches, otherwise >=2 blocks (v7x
    megacore) sized to minimise tail padding, capped at MAX_TB rows."""
    if batch <= 2 * sublane:
        return _round_up(batch, sublane)
    n_blocks = max(2, pl.cdiv(batch, MAX_TB))
    return _round_up(pl.cdiv(batch, n_blocks), sublane)


def dqn_kernel(x_ref,
               w1_ref, b1_ref,
               w2_ref, b2_ref,
               w3_ref, b3_ref,
               w4_ref, b4_ref,
               out_ref):
    wdt = w1_ref.dtype  # MXU input dtype (bf16 by default, f32 for the test)

    # layer1 + relu  (f32 accumulation, f32 elementwise)
    h = jnp.dot(x_ref[...].astype(wdt), w1_ref[...],
                preferred_element_type=jnp.float32)
    h = jnp.maximum(h + b1_ref[...], 0.0)

    # layer2 + relu
    h = jnp.dot(h.astype(wdt), w2_ref[...],
                preferred_element_type=jnp.float32)
    h = jnp.maximum(h + b2_ref[...], 0.0)

    # layer3 + relu
    h = jnp.dot(h.astype(wdt), w3_ref[...],
                preferred_element_type=jnp.float32)
    h = jnp.maximum(h + b3_ref[...], 0.0)

    # layer4 (no activation); output block is lane-dense (padded to 128)
    h = jnp.dot(h.astype(wdt), w4_ref[...],
                preferred_element_type=jnp.float32)
    out_ref[...] = (h + b4_ref[...]).astype(out_ref.dtype)


def _pad_params(params, compute_dtype):
    """Zero-pad layer1's input dim to the dtype sublane multiple and layer4's
    output dim to 128 lanes; cast weights to compute_dtype (biases stay f32)."""
    (w1, b1), (w2, b2), (w3, b3), (w4, b4) = params
    k_pad = _round_up(w1.shape[0], _sublane(compute_dtype))
    n_pad = _round_up(w4.shape[1], LANE)

    w1p = jnp.zeros((k_pad, w1.shape[1]), compute_dtype)
    w1p = w1p.at[: w1.shape[0], :].set(w1.astype(compute_dtype))
    w4p = jnp.zeros((w4.shape[0], n_pad), compute_dtype)
    w4p = w4p.at[:, : w4.shape[1]].set(w4.astype(compute_dtype))
    b4p = jnp.zeros((1, n_pad), jnp.float32)
    b4p = b4p.at[:, : b4.shape[1]].set(b4.astype(jnp.float32))

    padded = [
        (w1p, b1.astype(jnp.float32)),
        (w2.astype(compute_dtype), b2.astype(jnp.float32)),
        (w3.astype(compute_dtype), b3.astype(jnp.float32)),
        (w4p, b4p),
    ]
    return padded, k_pad, n_pad


def dqn_forward(x, params, compute_dtype=jnp.bfloat16):
    """x: [batch, n_observations] f32. params: list of (W [in,out], b [1,out]).

    Returns [batch, n_actions] f32 Q-values.  compute_dtype is the MXU input
    dtype (bf16 default; f32 path is bit-accurate vs the reference).
    """
    batch, n_obs = x.shape
    n_actions = params[-1][0].shape[1]

    padded, k_pad, n_pad = _pad_params(params, compute_dtype)
    (w1, b1), (w2, b2), (w3, b3), (w4, b4) = padded
    h1 = w1.shape[1]  # 256
    h2 = w2.shape[1]  # 256
    h3 = w3.shape[1]  # 128

    sublane = _sublane(compute_dtype)
    tb = _choose_tb(batch, sublane)
    b_pad = _round_up(batch, tb)

    # Pad x to (b_pad, k_pad) and cast once on the host side; skip the copy
    # entirely when no padding / cast is needed.
    if b_pad == batch and k_pad == n_obs and x.dtype == jnp.dtype(compute_dtype):
        x_p = x
    else:
        x_p = jnp.zeros((b_pad, k_pad), compute_dtype)
        x_p = x_p.at[:batch, :n_obs].set(x.astype(compute_dtype))

    grid = (b_pad // tb,)
    const = lambda i: (0, 0)          # weights/biases: resident, loaded once

    out = pl.pallas_call(
        dqn_kernel,
        out_shape=jax.ShapeDtypeStruct((b_pad, n_pad), jnp.float32),
        grid=grid,
        in_specs=[
            pl.BlockSpec((tb, k_pad), lambda i: (i, 0)),   # x block
            pl.BlockSpec((k_pad, h1), const),              # w1
            pl.BlockSpec((1, h1), const),                  # b1
            pl.BlockSpec((h1, h2), const),                 # w2
            pl.BlockSpec((1, h2), const),                  # b2
            pl.BlockSpec((h2, h3), const),                 # w3
            pl.BlockSpec((1, h3), const),                  # b3
            pl.BlockSpec((h3, n_pad), const),              # w4 (lane-padded)
            pl.BlockSpec((1, n_pad), const),               # b4 (lane-padded)
        ],
        out_specs=pl.BlockSpec((tb, n_pad), lambda i: (i, 0)),
        compiler_params=pltpu.CompilerParams(
            dimension_semantics=("parallel",),
        ),
    )(x_p, w1, b1, w2, b2, w3, b3, w4, b4)

    return out[:batch, :n_actions]


def init_params(key, n_observations, n_actions):
    """Deterministic init mirroring PyTorch nn.Linear shapes.

    PyTorch stores W as [out, in]; we store the transpose [in, out] so the
    kernel computes x @ W directly.
    """
    dims = [(n_observations, 256), (256, 256), (256, 128), (128, n_actions)]
    params = []
    for fan_in, fan_out in dims:
        kw, kb, key = jax.random.split(key, 3)
        bound = 1.0 / (fan_in ** 0.5)  # nn.Linear default uniform bound
        w = jax.random.uniform(kw, (fan_in, fan_out), jnp.float32, -bound, bound)
        b = jax.random.uniform(kb, (1, fan_out), jnp.float32, -bound, bound)
        params.append((w, b))
    return params


def dqn_reference(x, params):
    h = x
    for i, (w, b) in enumerate(params):
        h = h @ w + b
        if i < len(params) - 1:
            h = jnp.maximum(h, 0.0)
    return h


if __name__ == "__main__":
    key = jax.random.PRNGKey(0)
    k_x, k_p = jax.random.split(key)

    batch = 8
    n_observations = 16
    n_actions = 4

    x = jax.random.normal(k_x, (batch, n_observations), jnp.float32)
    params = init_params(k_p, n_observations, n_actions)
    ref = dqn_reference(x, params)

    # Exact-precision path (f32 MXU inputs) -- correctness check.
    out_f32 = jax.block_until_ready(dqn_forward(x, params, compute_dtype=jnp.float32))
    assert out_f32.shape == (batch, n_actions)
    assert jnp.allclose(out_f32, ref, atol=1e-4, rtol=1e-4), "f32 mismatch vs reference"

    # Default deployment path: bf16 MXU inputs, f32 accumulation/elementwise.
    out_bf16 = jax.block_until_ready(dqn_forward(x, params))
    assert out_bf16.shape == (batch, n_actions)
    assert jnp.allclose(out_bf16, ref, atol=5e-2, rtol=5e-2), "bf16 mismatch vs reference"

    # Ragged batch (pad-and-slice path).
    x2 = jax.random.normal(k_x, (5, n_observations), jnp.float32)
    out2 = jax.block_until_ready(dqn_forward(x2, params, compute_dtype=jnp.float32))
    assert jnp.allclose(out2, dqn_reference(x2, params), atol=1e-4, rtol=1e-4)

    # Multi-block grid (>=2 batch tiles -> exercises the 'parallel' batch axis
    # that v7x's two TensorCores split).
    x3 = jax.random.normal(k_x, (40, n_observations), jnp.float32)
    out3 = jax.block_until_ready(dqn_forward(x3, params, compute_dtype=jnp.float32))
    assert jnp.allclose(out3, dqn_reference(x3, params), atol=1e-4, rtol=1e-4)

    print("KERNEL_OK")
</pallas_src>

<mosaic_0001>
module attributes {stable_mosaic.version = 11 : i64} {
  func.func @dqn_kernel(%arg0: i32, %arg1: memref<8x16xf32, #tpu.memory_space<vmem>>, %arg2: memref<16x256xf32, #tpu.memory_space<vmem>>, %arg3: memref<1x256xf32, #tpu.memory_space<vmem>>, %arg4: memref<256x256xf32, #tpu.memory_space<vmem>>, %arg5: memref<1x256xf32, #tpu.memory_space<vmem>>, %arg6: memref<256x128xf32, #tpu.memory_space<vmem>>, %arg7: memref<1x128xf32, #tpu.memory_space<vmem>>, %arg8: memref<128x128xf32, #tpu.memory_space<vmem>>, %arg9: memref<1x128xf32, #tpu.memory_space<vmem>>, %arg10: memref<8x128xf32, #tpu.memory_space<vmem>>) attributes {dimension_semantics = [#tpu.dimension_semantics<parallel>], iteration_bounds = array<i64: 1>, scalar_prefetch = 0 : i64, scratch_operands = 0 : i64, tpu.core_type = #tpu.core_type<tc>, window_params = [{transform_indices = @transform_0, window_bounds = array<i64: 8, 16>}, {pipeline_mode = #tpu.pipeline_mode<synchronous>, transform_indices = @transform_1, window_bounds = array<i64: 16, 256>}, {pipeline_mode = #tpu.pipeline_mode<synchronous>, transform_indices = @transform_2, window_bounds = array<i64: 1, 256>}, {pipeline_mode = #tpu.pipeline_mode<synchronous>, transform_indices = @transform_3, window_bounds = array<i64: 256, 256>}, {pipeline_mode = #tpu.pipeline_mode<synchronous>, transform_indices = @transform_4, window_bounds = array<i64: 1, 256>}, {pipeline_mode = #tpu.pipeline_mode<synchronous>, transform_indices = @transform_5, window_bounds = array<i64: 256, 128>}, {pipeline_mode = #tpu.pipeline_mode<synchronous>, transform_indices = @transform_6, window_bounds = array<i64: 1, 128>}, {pipeline_mode = #tpu.pipeline_mode<synchronous>, transform_indices = @transform_7, window_bounds = array<i64: 128, 128>}, {pipeline_mode = #tpu.pipeline_mode<synchronous>, transform_indices = @transform_8, window_bounds = array<i64: 1, 128>}, {transform_indices = @transform_9, window_bounds = array<i64: 8, 128>}]} {
    %c0 = arith.constant 0 : index
    %c0_0 = arith.constant 0 : index
    %0 = vector.load %arg1[%c0, %c0_0] : memref<8x16xf32, #tpu.memory_space<vmem>>, vector<8x16xf32>
    %c0_1 = arith.constant 0 : index
    %c0_2 = arith.constant 0 : index
    %1 = vector.load %arg2[%c0_1, %c0_2] : memref<16x256xf32, #tpu.memory_space<vmem>>, vector<16x256xf32>
    %cst = arith.constant dense<0.000000e+00> : vector<8x256xf32>
    %2 = tpu.matmul %0, %1, %cst {dimension_numbers = #tpu.dot_dimension_numbers<[1], [0], [0], [1], [0, 0, 1, 1], [], []>} : vector<8x16xf32>, vector<16x256xf32>, vector<8x256xf32> -> vector<8x256xf32>
    %c0_3 = arith.constant 0 : index
    %c0_4 = arith.constant 0 : index
    %3 = vector.load %arg3[%c0_3, %c0_4] : memref<1x256xf32, #tpu.memory_space<vmem>>, vector<1x256xf32>
    %4 = vector.broadcast %3 : vector<1x256xf32> to vector<8x256xf32>
    %5 = arith.addf %2, %4 : vector<8x256xf32>
    %cst_5 = arith.constant 0.000000e+00 : f32
    %6 = vector.broadcast %cst_5 : f32 to vector<8x256xf32>
    %7 = arith.maximumf %5, %6 : vector<8x256xf32>
    %c0_6 = arith.constant 0 : index
    %c0_7 = arith.constant 0 : index
    %8 = vector.load %arg4[%c0_6, %c0_7] : memref<256x256xf32, #tpu.memory_space<vmem>>, vector<256x256xf32>
    %cst_8 = arith.constant dense<0.000000e+00> : vector<8x256xf32>
    %9 = tpu.matmul %7, %8, %cst_8 {dimension_numbers = #tpu.dot_dimension_numbers<[1], [0], [0], [1], [0, 0, 1, 1], [], []>} : vector<8x256xf32>, vector<256x256xf32>, vector<8x256xf32> -> vector<8x256xf32>
    %c0_9 = arith.constant 0 : index
    %c0_10 = arith.constant 0 : index
    %10 = vector.load %arg5[%c0_9, %c0_10] : memref<1x256xf32, #tpu.memory_space<vmem>>, vector<1x256xf32>
    %11 = vector.broadcast %10 : vector<1x256xf32> to vector<8x256xf32>
    %12 = arith.addf %9, %11 : vector<8x256xf32>
    %cst_11 = arith.constant 0.000000e+00 : f32
    %13 = vector.broadcast %cst_11 : f32 to vector<8x256xf32>
    %14 = arith.maximumf %12, %13 : vector<8x256xf32>
    %c0_12 = arith.constant 0 : index
    %c0_13 = arith.constant 0 : index
    %15 = vector.load %arg6[%c0_12, %c0_13] : memref<256x128xf32, #tpu.memory_space<vmem>>, vector<256x128xf32>
    %cst_14 = arith.constant dense<0.000000e+00> : vector<8x128xf32>
    %16 = tpu.matmul %14, %15, %cst_14 {dimension_numbers = #tpu.dot_dimension_numbers<[1], [0], [0], [1], [0, 0, 1, 1], [], []>} : vector<8x256xf32>, vector<256x128xf32>, vector<8x128xf32> -> vector<8x128xf32>
    %c0_15 = arith.constant 0 : index
    %c0_16 = arith.constant 0 : index
    %17 = vector.load %arg7[%c0_15, %c0_16] : memref<1x128xf32, #tpu.memory_space<vmem>>, vector<1x128xf32>
    %18 = vector.broadcast %17 : vector<1x128xf32> to vector<8x128xf32>
    %19 = arith.addf %16, %18 : vector<8x128xf32>
    %cst_17 = arith.constant 0.000000e+00 : f32
    %20 = vector.broadcast %cst_17 : f32 to vector<8x128xf32>
    %21 = arith.maximumf %19, %20 : vector<8x128xf32>
    %c0_18 = arith.constant 0 : index
    %c0_19 = arith.constant 0 : index
    %22 = vector.load %arg8[%c0_18, %c0_19] : memref<128x128xf32, #tpu.memory_space<vmem>>, vector<128x128xf32>
    %cst_20 = arith.constant dense<0.000000e+00> : vector<8x128xf32>
    %23 = tpu.matmul %21, %22, %cst_20 {dimension_numbers = #tpu.dot_dimension_numbers<[1], [0], [0], [1], [0, 0, 1, 1], [], []>} : vector<8x128xf32>, vector<128x128xf32>, vector<8x128xf32> -> vector<8x128xf32>
    %c0_21 = arith.constant 0 : index
    %c0_22 = arith.constant 0 : index
    %24 = vector.load %arg9[%c0_21, %c0_22] : memref<1x128xf32, #tpu.memory_space<vmem>>, vector<1x128xf32>
    %25 = vector.broadcast %24 : vector<1x128xf32> to vector<8x128xf32>
    %26 = arith.addf %23, %25 : vector<8x128xf32>
    %c0_23 = arith.constant 0 : index
    %c0_24 = arith.constant 0 : index
    %27 = vector.load %arg10[%c0_23, %c0_24] : memref<8x128xf32, #tpu.memory_space<vmem>>, vector<8x128xf32>
    tpu.vector_store %arg10[%c0_23, %c0_24], %26 {strides = array<i32>} : memref<8x128xf32, #tpu.memory_space<vmem>>, vector<8x128xf32>,
    return
  }
  func.func @transform_0(%arg0: i32) -> (i32, i32) {
    %c0_i32 = arith.constant 0 : i32
    %c0_i32_0 = arith.constant 0 : i32
    return %arg0, %c0_i32 : i32, i32
  }
  func.func @transform_1(%arg0: i32) -> (i32, i32) {
    %c0_i32 = arith.constant 0 : i32
    %c0_i32_0 = arith.constant 0 : i32
    %c0_i32_1 = arith.constant 0 : i32
    return %c0_i32, %c0_i32_0 : i32, i32
  }
  func.func @transform_2(%arg0: i32) -> (i32, i32) {
    %c0_i32 = arith.constant 0 : i32
    %c0_i32_0 = arith.constant 0 : i32
    %c0_i32_1 = arith.constant 0 : i32
    return %c0_i32, %c0_i32_0 : i32, i32
  }
  func.func @transform_3(%arg0: i32) -> (i32, i32) {
    %c0_i32 = arith.constant 0 : i32
    %c0_i32_0 = arith.constant 0 : i32
    %c0_i32_1 = arith.constant 0 : i32
    return %c0_i32, %c0_i32_0 : i32, i32
  }
  func.func @transform_4(%arg0: i32) -> (i32, i32) {
    %c0_i32 = arith.constant 0 : i32
    %c0_i32_0 = arith.constant 0 : i32
    %c0_i32_1 = arith.constant 0 : i32
    return %c0_i32, %c0_i32_0 : i32, i32
  }
  func.func @transform_5(%arg0: i32) -> (i32, i32) {
    %c0_i32 = arith.constant 0 : i32
    %c0_i32_0 = arith.constant 0 : i32
    %c0_i32_1 = arith.constant 0 : i32
    return %c0_i32, %c0_i32_0 : i32, i32
  }
  func.func @transform_6(%arg0: i32) -> (i32, i32) {
    %c0_i32 = arith.constant 0 : i32
    %c0_i32_0 = arith.constant 0 : i32
    %c0_i32_1 = arith.constant 0 : i32
    return %c0_i32, %c0_i32_0 : i32, i32
  }
  func.func @transform_7(%arg0: i32) -> (i32, i32) {
    %c0_i32 = arith.constant 0 : i32
    %c0_i32_0 = arith.constant 0 : i32
    %c0_i32_1 = arith.constant 0 : i32
    return %c0_i32, %c0_i32_0 : i32, i32
  }
  func.func @transform_8(%arg0: i32) -> (i32, i32) {
    %c0_i32 = arith.constant 0 : i32
    %c0_i32_0 = arith.constant 0 : i32
    %c0_i32_1 = arith.constant 0 : i32
    return %c0_i32, %c0_i32_0 : i32, i32
  }
  func.func @transform_9(%arg0: i32) -> (i32, i32) {
    %c0_i32 = arith.constant 0 : i32
    %c0_i32_0 = arith.constant 0 : i32
    return %arg0, %c0_i32 : i32, i32
  }
}

</mosaic_0001>

<llo_original>
// kernel: tpu_custom_call.1
$region0: #{tpu_custom_call.1}
  #allocation0 [shape = 'u32[]', space=smem, size = 0x4, offset = 0x4, fixed_abs, tag = 'smem constant byte address 0x4 - core index']
  #allocation1 [shape = 'u32[144,128]{1,0:T(1,128)}', space=vmem, size = 0x12000, scoped, tag = 'internal scratch']
  %s0 = inlined_call_operand.hbm [shape: f32[8,16], index: 0, kind: input, shape index: {}]
  %s1 = inlined_call_operand.hbm [shape: f32[16,256], index: 1, kind: input, shape index: {}]
  %s2 = inlined_call_operand.vmem [shape: f32[1,256], index: 2, kind: input, shape index: {}]
  %s3 = inlined_call_operand.hbm [shape: f32[256,256], index: 3, kind: input, shape index: {}]
  %s4 = inlined_call_operand.vmem [shape: f32[1,256], index: 4, kind: input, shape index: {}]
  %s5 = inlined_call_operand.hbm [shape: f32[256,128], index: 5, kind: input, shape index: {}]
  %s6 = inlined_call_operand.vmem [shape: f32[1,128], index: 6, kind: input, shape index: {}]
  %s7 = inlined_call_operand.hbm [shape: f32[128,128], index: 7, kind: input, shape index: {}]
  %s8 = inlined_call_operand.vmem [shape: f32[1,128], index: 8, kind: input, shape index: {}]
  %s9 = inlined_call_operand.hbm [shape: f32[8,128], index: 9, kind: output, shape index: {}]
  %s10 = sld [smem:[#allocation0]]
  $region66: #{tpu_custom_call.1} parent=0
    _
  %s12 = ssub.s32 1, %s10
  %s13 = scalar_select 0, %s12, %s10
  $region1: #{tpu_custom_call.1} parent=0
    #allocation2 [shape = 'u8[4096]{0}', space=vmem, size = 0x1000, scoped, tag = 'input window, operand 0, single buffered']
    #allocation3 [shape = 's32[1]{0}', space=sflag, size = 0x4, scoped, tag = 'scoped memory for tpu_custom_call.1']
    #allocation4 [shape = 's32[1]{0}', space=sflag, size = 0x4, scoped, tag = 'scoped memory for tpu_custom_call.1']
    #allocation5 [shape = 'u8[16384]{0}', space=vmem, size = 0x4000, scoped, tag = 'input window, operand 1, single buffered']
    #allocation6 [shape = 's32[1]{0}', space=sflag, size = 0x4, scoped, tag = 'scoped memory for tpu_custom_call.1']
    #allocation7 [shape = 'u8[262144]{0}', space=vmem, size = 0x40000, scoped, tag = 'input window, operand 3, single buffered']
    #allocation8 [shape = 'u8[131072]{0}', space=vmem, size = 0x20000, scoped, tag = 'input window, operand 5, single buffered']
    #allocation9 [shape = 's32[1]{0}', space=sflag, size = 0x4, scoped, tag = 'scoped memory for tpu_custom_call.1']
    #allocation10 [shape = 'u8[65536]{0}', space=vmem, size = 0x10000, scoped, tag = 'input window, operand 7, single buffered']
    #allocation11 [shape = 'u8[4096]{0}', space=vmem, size = 0x1000, scoped, tag = 'output window, operand 0, single buffered']
    %14 = vsyncpa [#allocation3], 0
    %15 = vsyncpa [#allocation6], 0
    %16 = vsyncpa [#allocation9], 0
    %17 = vsyncpa [#allocation4], 0
    // Predicated region
    $region2: #{tpu_custom_call.1} parent=1 // pred_check
      _
    $region3: #{tpu_custom_call.1} parent=1 // pred_check_branch
      %19 = sbr.rel (0) target = $region5
    $region4: #{tpu_custom_call.1} parent=1 // pred_region
      %s21 = ssub.s32 128, 128
      %22 = vsyncadd [#allocation3], %s21
      %s24 = sshll.u32 [#allocation2], 4
      %s25 = int_to_ptr.vmem [resolvable:$true] %s24
      %27 = dma.hbm_to_vmem [thread:$0]  %s0, 128, %s25, [#allocation3]
    $region5: #{tpu_custom_call.1} parent=1 // pred_fallthru
      _
    // Predicated region
    $region6: #{tpu_custom_call.1} parent=1 // pred_check
      _
    $region7: #{tpu_custom_call.1} parent=1 // pred_check_branch
      %29 = sbr.rel (0) target = $region9
    $region8: #{tpu_custom_call.1} parent=1 // pred_region
      %s31 = ssub.s32 512, 512
      %32 = vsyncadd [#allocation6], %s31
      %s33 = sshll.u32 [#allocation5], 4
      %s34 = int_to_ptr.vmem [resolvable:$true] %s33
      %39 = dma.hbm_to_vmem [thread:$0]  %s1, 512, %s34, [#allocation6], 256, 256, 16
    $region9: #{tpu_custom_call.1} parent=1 // pred_fallthru
      _
    // Predicated region
    $region10: #{tpu_custom_call.1} parent=1 // pred_check
      _
    $region11: #{tpu_custom_call.1} parent=1 // pred_check_branch
      %41 = sbr.rel (0) target = $region13
    $region12: #{tpu_custom_call.1} parent=1 // pred_region
      _
    $region13: #{tpu_custom_call.1} parent=1 // pred_fallthru
      _
    // Predicated region
    $region14: #{tpu_custom_call.1} parent=1 // pred_check
      _
    $region15: #{tpu_custom_call.1} parent=1 // pred_check_branch
      %43 = sbr.rel (0) target = $region17
    $region16: #{tpu_custom_call.1} parent=1 // pred_region
      %s45 = ssub.s32 8192, 8192
      %46 = vsyncadd [#allocation6], %s45
      %s47 = sshll.u32 [#allocation7], 4
      %s48 = int_to_ptr.vmem [resolvable:$true] %s47
      %53 = dma.hbm_to_vmem [thread:$0]  %s3, 8192, %s48, [#allocation6], 256, 256, 16
    $region17: #{tpu_custom_call.1} parent=1 // pred_fallthru
      _
    // Predicated region
    $region18: #{tpu_custom_call.1} parent=1 // pred_check
      _
    $region19: #{tpu_custom_call.1} parent=1 // pred_check_branch
      %55 = sbr.rel (0) target = $region21
    $region20: #{tpu_custom_call.1} parent=1 // pred_region
      _
    $region21: #{tpu_custom_call.1} parent=1 // pred_fallthru
      _
    // Predicated region
    $region22: #{tpu_custom_call.1} parent=1 // pred_check
      _
    $region23: #{tpu_custom_call.1} parent=1 // pred_check_branch
      %57 = sbr.rel (0) target = $region25
    $region24: #{tpu_custom_call.1} parent=1 // pred_region
      %s59 = ssub.s32 4096, 4096
      %60 = vsyncadd [#allocation9], %s59
      %s61 = sshll.u32 [#allocation8], 4
      %s62 = int_to_ptr.vmem [resolvable:$true] %s61
      %67 = dma.hbm_to_vmem [thread:$0]  %s5, 4096, %s62, [#allocation9], 128, 128, 8
    $region25: #{tpu_custom_call.1} parent=1 // pred_fallthru
      _
    // Predicated region
    $region26: #{tpu_custom_call.1} parent=1 // pred_check
      _
    $region27: #{tpu_custom_call.1} parent=1 // pred_check_branch
      %69 = sbr.rel (0) target = $region29
    $region28: #{tpu_custom_call.1} parent=1 // pred_region
      _
    $region29: #{tpu_custom_call.1} parent=1 // pred_fallthru
      _
    // Predicated region
    $region30: #{tpu_custom_call.1} parent=1 // pred_check
      _
    $region31: #{tpu_custom_call.1} parent=1 // pred_check_branch
      %71 = sbr.rel (0) target = $region33
    $region32: #{tpu_custom_call.1} parent=1 // pred_region
      %s73 = ssub.s32 2048, 2048
      %74 = vsyncadd [#allocation9], %s73
      %s75 = sshll.u32 [#allocation10], 4
      %s76 = int_to_ptr.vmem [resolvable:$true] %s75
      %81 = dma.hbm_to_vmem [thread:$0]  %s7, 2048, %s76, [#allocation9], 128, 128, 8
    $region33: #{tpu_custom_call.1} parent=1 // pred_fallthru
      _
    // Predicated region
    $region34: #{tpu_custom_call.1} parent=1 // pred_check
      _
    $region35: #{tpu_custom_call.1} parent=1 // pred_check_branch
      %83 = sbr.rel (0) target = $region37
    $region36: #{tpu_custom_call.1} parent=1 // pred_region
      _
    $region37: #{tpu_custom_call.1} parent=1 // pred_fallthru
      _
    // Predicated region
    $region38: #{tpu_custom_call.1} parent=1 // pred_check
      _
    $region39: #{tpu_custom_call.1} parent=1 // pred_check_branch
      %85 = sbr.rel (0) target = $region41
    $region40: #{tpu_custom_call.1} parent=1 // pred_region
      %86 = dma.done [#allocation3], 128
    $region41: #{tpu_custom_call.1} parent=1 // pred_fallthru
      _
    // Predicated region
    $region42: #{tpu_custom_call.1} parent=1 // pred_check
      _
    $region43: #{tpu_custom_call.1} parent=1 // pred_check_branch
      %88 = sbr.rel (0) target = $region45
    $region44: #{tpu_custom_call.1} parent=1 // pred_region
      %89 = dma.done [#allocation6], 512
    $region45: #{tpu_custom_call.1} parent=1 // pred_fallthru
      _
    // Predicated region
    $region46: #{tpu_custom_call.1} parent=1 // pred_check
      _
    $region47: #{tpu_custom_call.1} parent=1 // pred_check_branch
      %91 = sbr.rel (0) target = $region49
    $region48: #{tpu_custom_call.1} parent=1 // pred_region
      %92 = dma.done [#allocation6], 8192
    $region49: #{tpu_custom_call.1} parent=1 // pred_fallthru
      _
    // Predicated region
    $region50: #{tpu_custom_call.1} parent=1 // pred_check
      _
    $region51: #{tpu_custom_call.1} parent=1 // pred_check_branch
      %94 = sbr.rel (0) target = $region53
    $region52: #{tpu_custom_call.1} parent=1 // pred_region
      %95 = dma.done [#allocation9], 4096
    $region53: #{tpu_custom_call.1} parent=1 // pred_fallthru
      _
    // Predicated region
    $region54: #{tpu_custom_call.1} parent=1 // pred_check
      _
    $region55: #{tpu_custom_call.1} parent=1 // pred_check_branch
      %97 = sbr.rel (0) target = $region57
    $region56: #{tpu_custom_call.1} parent=1 // pred_region
      %98 = dma.done [#allocation9], 2048
    $region57: #{tpu_custom_call.1} parent=1 // pred_fallthru
      _
    %v99 = vld [vmem:[#allocation2] sm:$0xff]
    %v100 = vld [vmem:[#allocation5] sm:$0xff]
    %v101 = vld [vmem:[#allocation5 + $0x8] sm:$0xff]
    %v102 = vld [vmem:[#allocation5 + $0x10] sm:$0xff]
    %v103 = vld [vmem:[#allocation5 + $0x18] sm:$0xff]
    %v104 = vld [vmem:[%s2] sm:$0x3]
    %v106 = vlaneseq
    %v107 = vshrl.u32 %v106, 7
    %v108 = vsub.s32 0, %v107
    %v109 = vrot.slane %v104, %v108
    %v110 = vlaneseq
    %v111 = vshrl.u32 %v110, 7
    %v112 = vsub.s32 1, %v111
    %v113 = vrot.slane %v104, %v112
    %vm116 = vcmask 130048
    %v118 = vsel %vm116, %v99, 0
    %120 = vmatprep.subr.mxu0 %v101
    %121 = vmatpush1.msra.mxu0 %v100
    %122 = vmatprep.subr.mxu0 %v103
    %123 = vmatpush1.msra.mxu0 %v102
    %124 = vmatprep.subr.mxu0 0.0
    %125 = vmatpush1.msra.mxu0 0.0
    %126 = vmatprep.subr.mxu0 0.0
    %127 = vmatpush1.msra.mxu0 0.0
    %128 = vmatprep.subr.mxu0 0.0
    %129 = vmatpush1.msra.mxu0 0.0
    %130 = vmatprep.subr.mxu0 0.0
    %131 = vmatpush1.msra.mxu0 0.0
    %132 = vmatprep.subr.mxu0 0.0
    %133 = vmatpush1.msra.mxu0 0.0
    %134 = vmatprep.subr.mxu0 0.0
    %135 = vmatpush1.msra.mxu0 0.0
    %136 = vmatprep.subr.mxu0 0.0
    %137 = vmatpush1.msra.mxu0 0.0
    %138 = vmatprep.subr.mxu0 0.0
    %139 = vmatpush1.msra.mxu0 0.0
    %140 = vmatprep.subr.mxu0 0.0
    %141 = vmatpush1.msra.mxu0 0.0
    %142 = vmatprep.subr.mxu0 0.0
    %143 = vmatpush1.msra.mxu0 0.0
    %144 = vmatprep.subr.mxu0 0.0
    %145 = vmatpush1.msra.mxu0 0.0
    %146 = vmatprep.subr.mxu0 0.0
    %147 = vmatpush1.msra.mxu0 0.0
    %148 = vmatprep.subr.mxu0 0.0
    %149 = vmatpush1.msra.mxu0 0.0
    %150 = vmatprep.subr.mxu0 0.0
    %151 = vmatpush1.msra.mxu0 0.0
    %152 = vmatprep.subr.mxu0 0.0
    %153 = vmatpush1.msra.mxu0 0.0
    %154 = vmatprep.subr.mxu0 0.0
    %155 = vmatpush1.msra.mxu0 0.0
    %156 = vmatprep.subr.mxu0 0.0
    %157 = vmatpush1.msra.mxu0 0.0
    %158 = vmatprep.subr.mxu0 0.0
    %159 = vmatpush1.msra.mxu0 0.0
    %160 = vmatprep.subr.mxu0 0.0
    %161 = vmatpush1.msra.mxu0 0.0
    %162 = vmatprep.subr.mxu0 0.0
    %163 = vmatpush1.msra.mxu0 0.0
    %164 = vmatprep.subr.mxu0 0.0
    %165 = vmatpush1.msra.mxu0 0.0
    %166 = vmatprep.subr.mxu0 0.0
    %167 = vmatpush1.msra.mxu0 0.0
    %168 = vmatprep.subr.mxu0 0.0
    %169 = vmatpush1.msra.mxu0 0.0
    %170 = vmatprep.subr.mxu0 0.0
    %171 = vmatpush1.msra.mxu0 0.0
    %172 = vmatprep.subr.mxu0 0.0
    %173 = vmatpush1.msra.mxu0 0.0
    %174 = vmatprep.subr.mxu0 0.0
    %175 = vmatpush1.msra.mxu0 0.0
    %176 = vmatprep.subr.mxu0 0.0
    %177 = vmatpush1.msra.mxu0 0.0
    %178 = vmatprep.subr.mxu0 0.0
    %179 = vmatpush1.msra.mxu0 0.0
    %180 = vmatprep.subr.mxu0 0.0
    %181 = vmatpush1.msra.mxu0 0.0
    %182 = vmatprep.subr.mxu0 0.0
    %183 = vmatpush1.msra.mxu0 0.0
    %184 = vmatprep.mubr.f32.mxu0 0.0
    %185 = vmatmul.mubr.f32.gmra.mrb[0].mxu0 %v118
    %v186 = vpop.f32.mrb[0].mxu0
    %v187 = vadd.f32 %v109, %v186
    %v188 = vpop.f32.mrb[0].mxu0
    %v189 = vadd.f32 %v113, %v188
    %190 = vdwg.mxu0
    %v191 = vmax.f32 %v187, 0.0
    %v192 = vmax.f32 %v189, 0.0
    %v193 = vld [vmem:[#allocation7] sm:$0xff]
    %v194 = vld [vmem:[#allocation7 + $0x8] sm:$0xff]
    %v195 = vld [vmem:[#allocation7 + $0x10] sm:$0xff]
    %v196 = vld [vmem:[#allocation7 + $0x18] sm:$0xff]
    %v197 = vld [vmem:[#allocation7 + $0x20] sm:$0xff]
    %v198 = vld [vmem:[#allocation7 + $0x28] sm:$0xff]
    %v199 = vld [vmem:[#allocation7 + $0x30] sm:$0xff]
    %v200 = vld [vmem:[#allocation7 + $0x38] sm:$0xff]
    %v201 = vld [vmem:[#allocation7 + $0x40] sm:$0xff]
    %v202 = vld [vmem:[#allocation7 + $0x48] sm:$0xff]
    %v203 = vld [vmem:[#allocation7 + $0x50] sm:$0xff]
    %v204 = vld [vmem:[#allocation7 + $0x58] sm:$0xff]
    %v205 = vld [vmem:[#allocation7 + $0x60] sm:$0xff]
    %v206 = vld [vmem:[#allocation7 + $0x68] sm:$0xff]
    %v207 = vld [vmem:[#allocation7 + $0x70] sm:$0xff]
    %v208 = vld [vmem:[#allocation7 + $0x78] sm:$0xff]
    %v209 = vld [vmem:[#allocation7 + $0x80] sm:$0xff]
    %v210 = vld [vmem:[#allocation7 + $0x88] sm:$0xff]
    %v211 = vld [vmem:[#allocation7 + $0x90] sm:$0xff]
    %v212 = vld [vmem:[#allocation7 + $0x98] sm:$0xff]
    %v213 = vld [vmem:[#allocation7 + $0xa0] sm:$0xff]
    %v214 = vld [vmem:[#allocation7 + $0xa8] sm:$0xff]
    %v215 = vld [vmem:[#allocation7 + $0xb0] sm:$0xff]
    %v216 = vld [vmem:[#allocation7 + $0xb8] sm:$0xff]
    %v217 = vld [vmem:[#allocation7 + $0xc0] sm:$0xff]
    %v218 = vld [vmem:[#allocation7 + $0xc8] sm:$0xff]
    %v219 = vld [vmem:[#allocation7 + $0xd0] sm:$0xff]
    %v220 = vld [vmem:[#allocation7 + $0xd8] sm:$0xff]
    %v221 = vld [vmem:[#allocation7 + $0xe0] sm:$0xff]
    %v222 = vld [vmem:[#allocation7 + $0xe8] sm:$0xff]
    %v223 = vld [vmem:[#allocation7 + $0xf0] sm:$0xff]
    %v224 = vld [vmem:[#allocation7 + $0xf8] sm:$0xff]
    %v225 = vld [vmem:[#allocation7 + $0x100] sm:$0xff]
    %v226 = vld [vmem:[#allocation7 + $0x108] sm:$0xff]
    %v227 = vld [vmem:[#allocation7 + $0x110] sm:$0xff]
    %v228 = vld [vmem:[#allocation7 + $0x118] sm:$0xff]
    %v229 = vld [vmem:[#allocation7 + $0x120] sm:$0xff]
    %v230 = vld [vmem:[#allocation7 + $0x128] sm:$0xff]
    %v231 = vld [vmem:[#allocation7 + $0x130] sm:$0xff]
    %v232 = vld [vmem:[#allocation7 + $0x138] sm:$0xff]
    %v233 = vld [vmem:[#allocation7 + $0x140] sm:$0xff]
    %v234 = vld [vmem:[#allocation7 + $0x148] sm:$0xff]
    %v235 = vld [vmem:[#allocation7 + $0x150] sm:$0xff]
    %v236 = vld [vmem:[#allocation7 + $0x158] sm:$0xff]
    %v237 = vld [vmem:[#allocation7 + $0x160] sm:$0xff]
    %v238 = vld [vmem:[#allocation7 + $0x168] sm:$0xff]
    %v239 = vld [vmem:[#allocation7 + $0x170] sm:$0xff]
    %v240 = vld [vmem:[#allocation7 + $0x178] sm:$0xff]
    %v241 = vld [vmem:[#allocation7 + $0x180] sm:$0xff]
    %v242 = vld [vmem:[#allocation7 + $0x188] sm:$0xff]
    %v243 = vld [vmem:[#allocation7 + $0x190] sm:$0xff]
    %v244 = vld [vmem:[#allocation7 + $0x198] sm:$0xff]
    %v245 = vld [vmem:[#allocation7 + $0x1a0] sm:$0xff]
    %v246 = vld [vmem:[#allocation7 + $0x1a8] sm:$0xff]
    %v247 = vld [vmem:[#allocation7 + $0x1b0] sm:$0xff]
    %v248 = vld [vmem:[#allocation7 + $0x1b8] sm:$0xff]
    %v249 = vld [vmem:[#allocation7 + $0x1c0] sm:$0xff]
    %v250 = vld [vmem:[#allocation7 + $0x1c8] sm:$0xff]
    %v251 = vld [vmem:[#allocation7 + $0x1d0] sm:$0xff]
    %v252 = vld [vmem:[#allocation7 + $0x1d8] sm:$0xff]
    %v253 = vld [vmem:[#allocation7 + $0x1e0] sm:$0xff]
    %v254 = vld [vmem:[#allocation7 + $0x1e8] sm:$0xff]
    %v255 = vld [vmem:[#allocation7 + $0x1f0] sm:$0xff]
    %v256 = vld [vmem:[#allocation7 + $0x1f8] sm:$0xff]
    %v257 = vld [vmem:[%s4] sm:$0x3]
    %v259 = vlaneseq
    %v260 = vshrl.u32 %v259, 7
    %v261 = vsub.s32 0, %v260
    %v262 = vrot.slane %v257, %v261
    %v263 = vlaneseq
    %v264 = vshrl.u32 %v263, 7
    %v265 = vsub.s32 1, %v264
    %v266 = vrot.slane %v257, %v265
    %269 = vmatprep.subr.mxu0 %v194
    %270 = vmatpush1.msra.mxu0 %v193
    %271 = vmatprep.subr.mxu0 %v196
    %272 = vmatpush1.msra.mxu0 %v195
    %273 = vmatprep.subr.mxu0 %v198
    %274 = vmatpush1.msra.mxu0 %v197
    %275 = vmatprep.subr.mxu0 %v200
    %276 = vmatpush1.msra.mxu0 %v199
    %277 = vmatprep.subr.mxu0 %v202
    %278 = vmatpush1.msra.mxu0 %v201
    %279 = vmatprep.subr.mxu0 %v204
    %280 = vmatpush1.msra.mxu0 %v203
    %281 = vmatprep.subr.mxu0 %v206
    %282 = vmatpush1.msra.mxu0 %v205
    %283 = vmatprep.subr.mxu0 %v208
    %284 = vmatpush1.msra.mxu0 %v207
    %285 = vmatprep.subr.mxu0 %v210
    %286 = vmatpush1.msra.mxu0 %v209
    %287 = vmatprep.subr.mxu0 %v212
    %288 = vmatpush1.msra.mxu0 %v211
    %289 = vmatprep.subr.mxu0 %v214
    %290 = vmatpush1.msra.mxu0 %v213
    %291 = vmatprep.subr.mxu0 %v216
    %292 = vmatpush1.msra.mxu0 %v215
    %293 = vmatprep.subr.mxu0 %v218
    %294 = vmatpush1.msra.mxu0 %v217
    %295 = vmatprep.subr.mxu0 %v220
    %296 = vmatpush1.msra.mxu0 %v219
    %297 = vmatprep.subr.mxu0 %v222
    %298 = vmatpush1.msra.mxu0 %v221
    %299 = vmatprep.subr.mxu0 %v224
    %300 = vmatpush1.msra.mxu0 %v223
    %301 = vmatprep.subr.mxu0 %v226
    %302 = vmatpush1.msra.mxu0 %v225
    %303 = vmatprep.subr.mxu0 %v228
    %304 = vmatpush1.msra.mxu0 %v227
    %305 = vmatprep.subr.mxu0 %v230
    %306 = vmatpush1.msra.mxu0 %v229
    %307 = vmatprep.subr.mxu0 %v232
    %308 = vmatpush1.msra.mxu0 %v231
    %309 = vmatprep.subr.mxu0 %v234
    %310 = vmatpush1.msra.mxu0 %v233
    %311 = vmatprep.subr.mxu0 %v236
    %312 = vmatpush1.msra.mxu0 %v235
    %313 = vmatprep.subr.mxu0 %v238
    %314 = vmatpush1.msra.mxu0 %v237
    %315 = vmatprep.subr.mxu0 %v240
    %316 = vmatpush1.msra.mxu0 %v239
    %317 = vmatprep.subr.mxu0 %v242
    %318 = vmatpush1.msra.mxu0 %v241
    %319 = vmatprep.subr.mxu0 %v244
    %320 = vmatpush1.msra.mxu0 %v243
    %321 = vmatprep.subr.mxu0 %v246
    %322 = vmatpush1.msra.mxu0 %v245
    %323 = vmatprep.subr.mxu0 %v248
    %324 = vmatpush1.msra.mxu0 %v247
    %325 = vmatprep.subr.mxu0 %v250
    %326 = vmatpush1.msra.mxu0 %v249
    %327 = vmatprep.subr.mxu0 %v252
    %328 = vmatpush1.msra.mxu0 %v251
    %329 = vmatprep.subr.mxu0 %v254
    %330 = vmatpush1.msra.mxu0 %v253
    %331 = vmatprep.subr.mxu0 %v256
    %332 = vmatpush1.msra.mxu0 %v255
    %333 = vmatprep.mubr.f32.mxu0 %v192
    %334 = vmatmul.mubr.f32.gmra.mrb[0].mxu0 %v191
    %v335 = vpop.f32.mrb[0].mxu0
    %v336 = vadd.f32 %v262, %v335
    %v337 = vpop.f32.mrb[0].mxu0
    %v338 = vadd.f32 %v266, %v337
    %339 = vdwg.mxu0
    %v340 = vmax.f32 %v336, 0.0
    %v341 = vmax.f32 %v338, 0.0
    %v342 = vld [vmem:[#allocation8] sm:$0xff]
    %v343 = vld [vmem:[#allocation8 + $0x8] sm:$0xff]
    %v344 = vld [vmem:[#allocation8 + $0x10] sm:$0xff]
    %v345 = vld [vmem:[#allocation8 + $0x18] sm:$0xff]
    %v346 = vld [vmem:[#allocation8 + $0x20] sm:$0xff]
    %v347 = vld [vmem:[#allocation8 + $0x28] sm:$0xff]
    %v348 = vld [vmem:[#allocation8 + $0x30] sm:$0xff]
    %v349 = vld [vmem:[#allocation8 + $0x38] sm:$0xff]
    %v350 = vld [vmem:[#allocation8 + $0x40] sm:$0xff]
    %v351 = vld [vmem:[#allocation8 + $0x48] sm:$0xff]
    %v352 = vld [vmem:[#allocation8 + $0x50] sm:$0xff]
    %v353 = vld [vmem:[#allocation8 + $0x58] sm:$0xff]
    %v354 = vld [vmem:[#allocation8 + $0x60] sm:$0xff]
    %v355 = vld [vmem:[#allocation8 + $0x68] sm:$0xff]
    %v356 = vld [vmem:[#allocation8 + $0x70] sm:$0xff]
    %v357 = vld [vmem:[#allocation8 + $0x78] sm:$0xff]
    %v358 = vld [vmem:[#allocation8 + $0x80] sm:$0xff]
    %v359 = vld [vmem:[#allocation8 + $0x88] sm:$0xff]
    %v360 = vld [vmem:[#allocation8 + $0x90] sm:$0xff]
    %v361 = vld [vmem:[#allocation8 + $0x98] sm:$0xff]
    %v362 = vld [vmem:[#allocation8 + $0xa0] sm:$0xff]
    %v363 = vld [vmem:[#allocation8 + $0xa8] sm:$0xff]
    %v364 = vld [vmem:[#allocation8 + $0xb0] sm:$0xff]
    %v365 = vld [vmem:[#allocation8 + $0xb8] sm:$0xff]
    %v366 = vld [vmem:[#allocation8 + $0xc0] sm:$0xff]
    %v367 = vld [vmem:[#allocation8 + $0xc8] sm:$0xff]
    %v368 = vld [vmem:[#allocation8 + $0xd0] sm:$0xff]
    %v369 = vld [vmem:[#allocation8 + $0xd8] sm:$0xff]
    %v370 = vld [vmem:[#allocation8 + $0xe0] sm:$0xff]
    %v371 = vld [vmem:[#allocation8 + $0xe8] sm:$0xff]
    %v372 = vld [vmem:[#allocation8 + $0xf0] sm:$0xff]
    %v373 = vld [vmem:[#allocation8 + $0xf8] sm:$0xff]
    %v374 = vld [vmem:[%s6] sm:$0x1]
    %v376 = vlaneseq
    %v377 = vshrl.u32 %v376, 7
    %v378 = vsub.s32 0, %v377
    %v379 = vrot.slane %v374, %v378
    %381 = vmatprep.subr.mxu0 0.0
    %382 = vmatpush1.msra.mxu0 %v342
    %383 = vmatprep.subr.mxu0 0.0
    %384 = vmatpush1.msra.mxu0 %v343
    %385 = vmatprep.subr.mxu0 0.0
    %386 = vmatpush1.msra.mxu0 %v344
    %387 = vmatprep.subr.mxu0 0.0
    %388 = vmatpush1.msra.mxu0 %v345
    %389 = vmatprep.subr.mxu0 0.0
    %390 = vmatpush1.msra.mxu0 %v346
    %391 = vmatprep.subr.mxu0 0.0
    %392 = vmatpush1.msra.mxu0 %v347
    %393 = vmatprep.subr.mxu0 0.0
    %394 = vmatpush1.msra.mxu0 %v348
    %395 = vmatprep.subr.mxu0 0.0
    %396 = vmatpush1.msra.mxu0 %v349
    %397 = vmatprep.subr.mxu0 0.0
    %398 = vmatpush1.msra.mxu0 %v350
    %399 = vmatprep.subr.mxu0 0.0
    %400 = vmatpush1.msra.mxu0 %v351
    %401 = vmatprep.subr.mxu0 0.0
    %402 = vmatpush1.msra.mxu0 %v352
    %403 = vmatprep.subr.mxu0 0.0
    %404 = vmatpush1.msra.mxu0 %v353
    %405 = vmatprep.subr.mxu0 0.0
    %406 = vmatpush1.msra.mxu0 %v354
    %407 = vmatprep.subr.mxu0 0.0
    %408 = vmatpush1.msra.mxu0 %v355
    %409 = vmatprep.subr.mxu0 0.0
    %410 = vmatpush1.msra.mxu0 %v356
    %411 = vmatprep.subr.mxu0 0.0
    %412 = vmatpush1.msra.mxu0 %v357
    %413 = vmatprep.subr.mxu0 0.0
    %414 = vmatpush1.msra.mxu0 %v358
    %415 = vmatprep.subr.mxu0 0.0
    %416 = vmatpush1.msra.mxu0 %v359
    %417 = vmatprep.subr.mxu0 0.0
    %418 = vmatpush1.msra.mxu0 %v360
    %419 = vmatprep.subr.mxu0 0.0
    %420 = vmatpush1.msra.mxu0 %v361
    %421 = vmatprep.subr.mxu0 0.0
    %422 = vmatpush1.msra.mxu0 %v362
    %423 = vmatprep.subr.mxu0 0.0
    %424 = vmatpush1.msra.mxu0 %v363
    %425 = vmatprep.subr.mxu0 0.0
    %426 = vmatpush1.msra.mxu0 %v364
    %427 = vmatprep.subr.mxu0 0.0
    %428 = vmatpush1.msra.mxu0 %v365
    %429 = vmatprep.subr.mxu0 0.0
    %430 = vmatpush1.msra.mxu0 %v366
    %431 = vmatprep.subr.mxu0 0.0
    %432 = vmatpush1.msra.mxu0 %v367
    %433 = vmatprep.subr.mxu0 0.0
    %434 = vmatpush1.msra.mxu0 %v368
    %435 = vmatprep.subr.mxu0 0.0
    %436 = vmatpush1.msra.mxu0 %v369
    %437 = vmatprep.subr.mxu0 0.0
    %438 = vmatpush1.msra.mxu0 %v370
    %439 = vmatprep.subr.mxu0 0.0
    %440 = vmatpush1.msra.mxu0 %v371
    %441 = vmatprep.subr.mxu0 0.0
    %442 = vmatpush1.msra.mxu0 %v372
    %443 = vmatprep.subr.mxu0 0.0
    %444 = vmatpush1.msra.mxu0 %v373
    %445 = vmatprep.mubr.f32.mxu0 %v341
    %446 = vmatmul.mubr.f32.gmra.mrb[0].mxu0 %v340
    %v447 = vpop.f32.mrb[0].mxu0
    %v448 = vadd.f32 %v379, %v447
    %v449 = vpop.f32.mrb[0].mxu0
    %450 = vdwg.mxu0
    %v451 = vmax.f32 %v448, 0.0
    %v452 = vld [vmem:[#allocation10] sm:$0xff]
    %v453 = vld [vmem:[#allocation10 + $0x8] sm:$0xff]
    %v454 = vld [vmem:[#allocation10 + $0x10] sm:$0xff]
    %v455 = vld [vmem:[#allocation10 + $0x18] sm:$0xff]
    %v456 = vld [vmem:[#allocation10 + $0x20] sm:$0xff]
    %v457 = vld [vmem:[#allocation10 + $0x28] sm:$0xff]
    %v458 = vld [vmem:[#allocation10 + $0x30] sm:$0xff]
    %v459 = vld [vmem:[#allocation10 + $0x38] sm:$0xff]
    %v460 = vld [vmem:[#allocation10 + $0x40] sm:$0xff]
    %v461 = vld [vmem:[#allocation10 + $0x48] sm:$0xff]
    %v462 = vld [vmem:[#allocation10 + $0x50] sm:$0xff]
    %v463 = vld [vmem:[#allocation10 + $0x58] sm:$0xff]
    %v464 = vld [vmem:[#allocation10 + $0x60] sm:$0xff]
    %v465 = vld [vmem:[#allocation10 + $0x68] sm:$0xff]
    %v466 = vld [vmem:[#allocation10 + $0x70] sm:$0xff]
    %v467 = vld [vmem:[#allocation10 + $0x78] sm:$0xff]
    %v468 = vld [vmem:[%s8] sm:$0x1]
    %v470 = vlaneseq
    %v471 = vshrl.u32 %v470, 7
    %v472 = vsub.s32 0, %v471
    %v473 = vrot.slane %v468, %v472
    %475 = vmatprep.subr.mxu0 0.0
    %476 = vmatpush1.msra.mxu0 %v452
    %477 = vmatprep.subr.mxu0 0.0
    %478 = vmatpush1.msra.mxu0 %v453
    %479 = vmatprep.subr.mxu0 0.0
    %480 = vmatpush1.msra.mxu0 %v454
    %481 = vmatprep.subr.mxu0 0.0
    %482 = vmatpush1.msra.mxu0 %v455
    %483 = vmatprep.subr.mxu0 0.0
    %484 = vmatpush1.msra.mxu0 %v456
    %485 = vmatprep.subr.mxu0 0.0
    %486 = vmatpush1.msra.mxu0 %v457
    %487 = vmatprep.subr.mxu0 0.0
    %488 = vmatpush1.msra.mxu0 %v458
    %489 = vmatprep.subr.mxu0 0.0
    %490 = vmatpush1.msra.mxu0 %v459
    %491 = vmatprep.subr.mxu0 0.0
    %492 = vmatpush1.msra.mxu0 %v460
    %493 = vmatprep.subr.mxu0 0.0
    %494 = vmatpush1.msra.mxu0 %v461
    %495 = vmatprep.subr.mxu0 0.0
    %496 = vmatpush1.msra.mxu0 %v462
    %497 = vmatprep.subr.mxu0 0.0
    %498 = vmatpush1.msra.mxu0 %v463
    %499 = vmatprep.subr.mxu0 0.0
    %500 = vmatpush1.msra.mxu0 %v464
    %501 = vmatprep.subr.mxu0 0.0
    %502 = vmatpush1.msra.mxu0 %v465
    %503 = vmatprep.subr.mxu0 0.0
    %504 = vmatpush1.msra.mxu0 %v466
    %505 = vmatprep.subr.mxu0 0.0
    %506 = vmatpush1.msra.mxu0 %v467
    %507 = vmatprep.subr.mxu0 0.0
    %508 = vmatpush1.msra.mxu0 0.0
    %509 = vmatprep.subr.mxu0 0.0
    %510 = vmatpush1.msra.mxu0 0.0
    %511 = vmatprep.subr.mxu0 0.0
    %512 = vmatpush1.msra.mxu0 0.0
    %513 = vmatprep.subr.mxu0 0.0
    %514 = vmatpush1.msra.mxu0 0.0
    %515 = vmatprep.subr.mxu0 0.0
    %516 = vmatpush1.msra.mxu0 0.0
    %517 = vmatprep.subr.mxu0 0.0
    %518 = vmatpush1.msra.mxu0 0.0
    %519 = vmatprep.subr.mxu0 0.0
    %520 = vmatpush1.msra.mxu0 0.0
    %521 = vmatprep.subr.mxu0 0.0
    %522 = vmatpush1.msra.mxu0 0.0
    %523 = vmatprep.subr.mxu0 0.0
    %524 = vmatpush1.msra.mxu0 0.0
    %525 = vmatprep.subr.mxu0 0.0
    %526 = vmatpush1.msra.mxu0 0.0
    %527 = vmatprep.subr.mxu0 0.0
    %528 = vmatpush1.msra.mxu0 0.0
    %529 = vmatprep.subr.mxu0 0.0
    %530 = vmatpush1.msra.mxu0 0.0
    %531 = vmatprep.subr.mxu0 0.0
    %532 = vmatpush1.msra.mxu0 0.0
    %533 = vmatprep.subr.mxu0 0.0
    %534 = vmatpush1.msra.mxu0 0.0
    %535 = vmatprep.subr.mxu0 0.0
    %536 = vmatpush1.msra.mxu0 0.0
    %537 = vmatprep.subr.mxu0 0.0
    %538 = vmatpush1.msra.mxu0 0.0
    %539 = vmatprep.mubr.f32.mxu0 0.0
    %540 = vmatmul.mubr.f32.gmra.mrb[0].mxu0 %v451
    %v541 = vpop.f32.mrb[0].mxu0
    %v542 = vadd.f32 %v473, %v541
    %v543 = vpop.f32.mrb[0].mxu0
    %544 = vdwg.mxu0
    %545 = vst [vmem:[#allocation11] sm:$0xff] %v542
    // Predicated region
    $region58: #{tpu_custom_call.1} parent=1 // pred_check
      _
    $region59: #{tpu_custom_call.1} parent=1 // pred_check_branch
      %547 = sbr.rel (0) target = $region61
    $region60: #{tpu_custom_call.1} parent=1 // pred_region
      %s549 = ssub.s32 128, 128
      %550 = vsyncadd [#allocation4], %s549
      %s552 = sshll.u32 [#allocation11], 4
      %s553 = int_to_ptr.vmem [resolvable:$true] %s552
      %555 = dma.vmem_to_hbm [thread:$0]  %s553, 128, %s9, [#allocation4]
    $region61: #{tpu_custom_call.1} parent=1 // pred_fallthru
      _
    // Predicated region
    $region62: #{tpu_custom_call.1} parent=1 // pred_check
      _
    $region63: #{tpu_custom_call.1} parent=1 // pred_check_branch
      %557 = sbr.rel (0) target = $region65
    $region64: #{tpu_custom_call.1} parent=1 // pred_region
      %558 = dma.done [#allocation4], 128
    $region65: #{tpu_custom_call.1} parent=1 // pred_fallthru
      _
    %559 = vsyncpa [#allocation3], 1
    %560 = vsyncpa [#allocation6], 1
    %561 = vsyncpa [#allocation9], 1
    %562 = vsyncpa [#allocation4], 1

</llo_original>
